<compile_context>
chip_gen: v7x
topology: tpu7x:2x2x1
jax: 0.10.0
libtpu: 0.0.40
codegen_flags: <defaults>
</compile_context>

<pallas_src>
import functools

import jax
import jax.numpy as jnp
import numpy as np
from jax.experimental import pallas as pl
from jax.experimental.pallas import tpu as pltpu


# ---------------------------------------------------------------------------
# Pallas kernel: fused  sum -> spatial-mean -> conv1d(as matmul) -> softmax
#                      -> attention-weighting -> 1x1 conv -> batchnorm
# ---------------------------------------------------------------------------
def _msask_kernel(bs, p, feats_ref, band_ref, bias_ref, w1_ref, gb_ref,
                  out_ref):
    feats = feats_ref[...]                          # (K, C, BSP) f32
    K, C, BSP = feats.shape
    KC = K * C

    # 0/1 batch-selector matrices built from iota (no data DMA needed).
    def batch_sel(shape, batch_axis):
        b = jax.lax.broadcasted_iota(jnp.int32, shape, batch_axis)
        j = jax.lax.broadcasted_iota(jnp.int32, shape, 1 - batch_axis)
        return ((j >= b * p) & (j < (b + 1) * p)).astype(jnp.float32)

    # ---- S: spatial mean per (channel, batch) of the scale-sum -------------
    U = jnp.sum(feats, axis=0)                      # (C, BSP)   VPU adds
    pool = batch_sel((BSP, bs), 1)                  # (BSP, BS)
    S = jnp.dot(U, pool, preferred_element_type=jnp.float32) * (1.0 / p)
    #                                               # (C, BS)

    # ---- all K per-scale Conv1d(1,1,ks) over channels as ONE banded matmul -
    logits = jnp.dot(band_ref[...], S, preferred_element_type=jnp.float32)
    logits = (logits + bias_ref[...]).reshape(K, C, bs)      # (K, C, BS)

    # ---- softmax over the scale dimension -----------------------------------
    m = jnp.max(logits, axis=0, keepdims=True)
    e = jnp.exp(logits - m)
    att = e / jnp.sum(e, axis=0, keepdims=True)              # (K, C, BS)

    # ---- attention weighting + 1x1 conv fused into one matmul ---------------
    expand = batch_sel((bs, BSP), 0)                         # (BS, BSP)
    att_b = jnp.dot(att.reshape(KC, bs), expand,
                    preferred_element_type=jnp.float32)      # (KC, BSP)
    v = att_b * feats.reshape(KC, BSP)                       # (KC, BSP)
    Vp = jnp.dot(w1_ref[...], v,
                 preferred_element_type=jnp.float32)         # (C, BSP)

    # ---- BatchNorm2d: training-mode batch stats, biased variance, eps=1e-5 --
    inv_n = 1.0 / BSP
    mean = jnp.sum(Vp, axis=1, keepdims=True) * inv_n        # (C, 1)
    centered = Vp - mean
    var = jnp.sum(centered * centered, axis=1, keepdims=True) * inv_n
    gb = gb_ref[...]                                         # (C, 2)
    scale = gb[:, 0:1] * jax.lax.rsqrt(var + 1e-5)           # (C, 1)  EUP
    out_ref[...] = (centered * scale + gb[:, 1:2]).astype(out_ref.dtype)


# ---------------------------------------------------------------------------
# Glue: parameter packing + pallas_call wrapper
# ---------------------------------------------------------------------------
def _band_matrices(c1w, C):
    """Conv1d(1,1,ks,pad=(ks-1)//2) over a length-C axis as (K, C, C) matmuls.

    out[j] = sum_t w[t] * in[j + t - pad]   (cross-correlation, PyTorch conv)
    """
    K, KS = c1w.shape
    pad = (KS - 1) // 2
    j = jnp.arange(C)[:, None]          # output index
    i = jnp.arange(C)[None, :]          # input index
    t = i - j + pad
    valid = (t >= 0) & (t < KS)
    tc = jnp.clip(t, 0, KS - 1)
    return jnp.where(valid[None, :, :], c1w[:, tc], 0.0)   # (K, C, C)


@jax.jit
def multi_scale_attention_sk(feats, c1w, c1b, w1, gamma, beta):
    """feats: (K, BS, C, H, W) float32 (stack of conv_outs)."""
    K, BS, C, H, W = feats.shape
    P = H * W
    BSP = BS * P

    # Lane-dense layout: fold batch into the lane (spatial) axis -> last dim
    # of every big operand is BS*P (= 128 at test shapes): unmasked stores.
    feats_flat = (feats.astype(jnp.float32)
                  .reshape(K, BS, C, P)
                  .transpose(0, 2, 1, 3)
                  .reshape(K, C, BSP))

    band_all = _band_matrices(c1w.astype(jnp.float32), C).reshape(K * C, C)
    bias_col = jnp.repeat(c1b.astype(jnp.float32), C).reshape(K * C, 1)
    w1_flat = w1.astype(jnp.float32).reshape(C, K * C)   # in-ch = k*C + c
    gb = jnp.stack([gamma.astype(jnp.float32),
                    beta.astype(jnp.float32)], axis=1)   # (C, 2)

    kernel = functools.partial(_msask_kernel, BS, P)

    out = pl.pallas_call(
        kernel,
        out_shape=jax.ShapeDtypeStruct((C, BSP), jnp.float32),
        grid=(1,),
        in_specs=[
            pl.BlockSpec((K, C, BSP), lambda i: (0, 0, 0)),
            pl.BlockSpec((K * C, C), lambda i: (0, 0)),
            pl.BlockSpec((K * C, 1), lambda i: (0, 0)),
            pl.BlockSpec((C, K * C), lambda i: (0, 0)),
            pl.BlockSpec((C, 2), lambda i: (0, 0)),
        ],
        out_specs=pl.BlockSpec((C, BSP), lambda i: (0, 0)),
        compiler_params=pltpu.CompilerParams(
            dimension_semantics=("arbitrary",)),
    )(feats_flat, band_all, bias_col, w1_flat, gb)

    # back to (BS, C, H, W)
    return out.reshape(C, BS, P).transpose(1, 0, 2).reshape(BS, C, H, W)


# ---------------------------------------------------------------------------
# Pure-JAX reference (mirrors the PyTorch forward) for validation
# ---------------------------------------------------------------------------
def reference(feats, c1w, c1b, w1, gamma, beta, eps=1e-5):
    K, BS, C, H, W = feats.shape
    U = feats.sum(0)
    S = U.mean(-1).mean(-1)                                     # (BS, C)
    pad = (c1w.shape[1] - 1) // 2
    Sp = jnp.pad(S, ((0, 0), (pad, pad)))
    logits = []
    for i in range(K):
        acc = jnp.zeros_like(S)
        for t in range(c1w.shape[1]):
            acc = acc + c1w[i, t] * Sp[:, t:t + C]
        logits.append(acc + c1b[i])
    logits = jnp.stack(logits, 0)                               # (K, BS, C)
    att = jax.nn.softmax(logits, axis=0)
    v = att[..., None, None] * feats                            # (K,BS,C,H,W)
    v_ls = jnp.concatenate([v[i] for i in range(K)], axis=1)    # (BS,K*C,H,W)
    Vp = jnp.einsum('oc,bchw->bohw', w1, v_ls)
    mean = Vp.mean((0, 2, 3))
    var = Vp.var((0, 2, 3))                                     # biased
    return (gamma[None, :, None, None]
            * (Vp - mean[None, :, None, None])
            / jnp.sqrt(var[None, :, None, None] + eps)
            + beta[None, :, None, None])


if __name__ == "__main__":
    # small shapes consistent with the module: scales=4 conv outputs of
    # (bs=2, channel=8, h=8, w=8); kernel_size=3.
    SCALES, BS, C, H, W, KS = 4, 2, 8, 8, 8, 3

    key = jax.random.PRNGKey(0)
    ks = jax.random.split(key, 6)
    conv_outs = [jax.random.normal(jax.random.fold_in(ks[0], i),
                                   (BS, C, H, W), jnp.float32)
                 for i in range(SCALES)]
    feats = jnp.stack(conv_outs, 0)

    # deterministic parameter init (shapes per __init__)
    c1w = 0.3 * jax.random.normal(ks[1], (SCALES, KS), jnp.float32)   # Conv1d(1,1,3)
    c1b = 0.1 * jax.random.normal(ks[2], (SCALES,), jnp.float32)
    w1 = jax.random.normal(ks[3], (C, SCALES * C), jnp.float32) / np.sqrt(SCALES * C)
    gamma = 1.0 + 0.1 * jax.random.normal(ks[4], (C,), jnp.float32)   # BatchNorm2d weight
    beta = 0.05 * jax.random.normal(ks[5], (C,), jnp.float32)         # BatchNorm2d bias
    # TODO(synk): BatchNorm running_mean/var buffer updates (a stateful side
    # effect that does not affect the returned tensor) are not reproduced.

    out = multi_scale_attention_sk(feats, c1w, c1b, w1, gamma, beta)
    out = jax.block_until_ready(out)

    ref = reference(feats, c1w, c1b, w1, gamma, beta)
    if not bool(jnp.allclose(out, ref, atol=5e-4, rtol=5e-4)):
        raise AssertionError(
            f"mismatch: max abs err = {float(jnp.max(jnp.abs(out - ref)))}")
    print("KERNEL_OK")
</pallas_src>

<mosaic_0001>
module attributes {stable_mosaic.version = 11 : i64} {
  func.func @_msask_kernel(%arg0: i32, %arg1: memref<4x8x128xf32, #tpu.memory_space<vmem>>, %arg2: memref<32x8xf32, #tpu.memory_space<vmem>>, %arg3: memref<32x1xf32, #tpu.memory_space<vmem>>, %arg4: memref<8x32xf32, #tpu.memory_space<vmem>>, %arg5: memref<8x2xf32, #tpu.memory_space<vmem>>, %arg6: memref<8x128xf32, #tpu.memory_space<vmem>>) attributes {dimension_semantics = [#tpu.dimension_semantics<arbitrary>], iteration_bounds = array<i64: 1>, scalar_prefetch = 0 : i64, scratch_operands = 0 : i64, tpu.core_type = #tpu.core_type<tc>, window_params = [{pipeline_mode = #tpu.pipeline_mode<synchronous>, transform_indices = @transform_0, window_bounds = array<i64: 4, 8, 128>}, {pipeline_mode = #tpu.pipeline_mode<synchronous>, transform_indices = @transform_1, window_bounds = array<i64: 32, 8>}, {pipeline_mode = #tpu.pipeline_mode<synchronous>, transform_indices = @transform_2, window_bounds = array<i64: 32, 1>}, {pipeline_mode = #tpu.pipeline_mode<synchronous>, transform_indices = @transform_3, window_bounds = array<i64: 8, 32>}, {pipeline_mode = #tpu.pipeline_mode<synchronous>, transform_indices = @transform_4, window_bounds = array<i64: 8, 2>}, {pipeline_mode = #tpu.pipeline_mode<synchronous>, transform_indices = @transform_5, window_bounds = array<i64: 8, 128>}]} {
    %c0 = arith.constant 0 : index
    %c0_0 = arith.constant 0 : index
    %c0_1 = arith.constant 0 : index
    %0 = vector.load %arg1[%c0, %c0_0, %c0_1] : memref<4x8x128xf32, #tpu.memory_space<vmem>>, vector<4x8x128xf32>
    %cst = arith.constant dense<0.000000e+00> : vector<8x128xf32>
    %1 = vector.multi_reduction <add>, %0, %cst [0] : vector<4x8x128xf32> to vector<8x128xf32>
    %2 = tpu.iota {dimensions = array<i32: 1>} : vector<128x2xi32>
    %3 = tpu.iota {dimensions = array<i32: 0>} : vector<128x2xi32>
    %c64_i32 = arith.constant 64 : i32
    %4 = vector.broadcast %c64_i32 : i32 to vector<128x2xi32>
    %5 = arith.muli %2, %4 : vector<128x2xi32>
    %6 = arith.cmpi sge, %3, %5 : vector<128x2xi32>
    %c1_i32 = arith.constant 1 : i32
    %7 = vector.broadcast %c1_i32 : i32 to vector<128x2xi32>
    %8 = arith.addi %2, %7 : vector<128x2xi32>
    %c64_i32_2 = arith.constant 64 : i32
    %9 = vector.broadcast %c64_i32_2 : i32 to vector<128x2xi32>
    %10 = arith.muli %8, %9 : vector<128x2xi32>
    %11 = arith.cmpi slt, %3, %10 : vector<128x2xi32>
    %12 = arith.andi %6, %11 : vector<128x2xi1>
    %13 = arith.extui %12 : vector<128x2xi1> to vector<128x2xi32>
    %14 = arith.sitofp %13 : vector<128x2xi32> to vector<128x2xf32>
    %cst_3 = arith.constant dense<0.000000e+00> : vector<8x2xf32>
    %15 = tpu.matmul %1, %14, %cst_3 {dimension_numbers = #tpu.dot_dimension_numbers<[1], [0], [0], [1], [0, 0, 1, 1], [], []>} : vector<8x128xf32>, vector<128x2xf32>, vector<8x2xf32> -> vector<8x2xf32>
    %cst_4 = arith.constant 1.562500e-02 : f32
    %16 = vector.broadcast %cst_4 : f32 to vector<8x2xf32>
    %17 = arith.mulf %15, %16 : vector<8x2xf32>
    %c0_5 = arith.constant 0 : index
    %c0_6 = arith.constant 0 : index
    %18 = vector.load %arg2[%c0_5, %c0_6] : memref<32x8xf32, #tpu.memory_space<vmem>>, vector<32x8xf32>
    %cst_7 = arith.constant dense<0.000000e+00> : vector<32x2xf32>
    %19 = tpu.matmul %18, %17, %cst_7 {dimension_numbers = #tpu.dot_dimension_numbers<[1], [0], [0], [1], [0, 0, 1, 1], [], []>} : vector<32x8xf32>, vector<8x2xf32>, vector<32x2xf32> -> vector<32x2xf32>
    %c0_8 = arith.constant 0 : index
    %c0_9 = arith.constant 0 : index
    %20 = vector.load %arg3[%c0_8, %c0_9] : memref<32x1xf32, #tpu.memory_space<vmem>>, vector<32x1xf32>
    %21 = vector.broadcast %20 : vector<32x1xf32> to vector<32x2xf32>
    %22 = arith.addf %19, %21 : vector<32x2xf32>
    %23 = vector.shape_cast %22 : vector<32x2xf32> to vector<4x8x2xf32>
    %cst_10 = arith.constant dense<0xFF800000> : vector<8x2xf32>
    %24 = vector.multi_reduction <maximumf>, %23, %cst_10 [0] : vector<4x8x2xf32> to vector<8x2xf32>
    %25 = vector.shape_cast %24 : vector<8x2xf32> to vector<1x8x2xf32>
    %26 = vector.broadcast %25 : vector<1x8x2xf32> to vector<4x8x2xf32>
    %27 = arith.subf %23, %26 : vector<4x8x2xf32>
    %28 = math.exp %27 : vector<4x8x2xf32>
    %cst_11 = arith.constant dense<0.000000e+00> : vector<8x2xf32>
    %29 = vector.multi_reduction <add>, %28, %cst_11 [0] : vector<4x8x2xf32> to vector<8x2xf32>
    %30 = vector.shape_cast %29 : vector<8x2xf32> to vector<1x8x2xf32>
    %31 = vector.broadcast %30 : vector<1x8x2xf32> to vector<4x8x2xf32>
    %32 = arith.divf %28, %31 : vector<4x8x2xf32>
    %33 = tpu.iota {dimensions = array<i32: 0>} : vector<2x128xi32>
    %34 = tpu.iota {dimensions = array<i32: 1>} : vector<2x128xi32>
    %c64_i32_12 = arith.constant 64 : i32
    %35 = vector.broadcast %c64_i32_12 : i32 to vector<2x128xi32>
    %36 = arith.muli %33, %35 : vector<2x128xi32>
    %37 = arith.cmpi sge, %34, %36 : vector<2x128xi32>
    %c1_i32_13 = arith.constant 1 : i32
    %38 = vector.broadcast %c1_i32_13 : i32 to vector<2x128xi32>
    %39 = arith.addi %33, %38 : vector<2x128xi32>
    %c64_i32_14 = arith.constant 64 : i32
    %40 = vector.broadcast %c64_i32_14 : i32 to vector<2x128xi32>
    %41 = arith.muli %39, %40 : vector<2x128xi32>
    %42 = arith.cmpi slt, %34, %41 : vector<2x128xi32>
    %43 = arith.andi %37, %42 : vector<2x128xi1>
    %44 = arith.extui %43 : vector<2x128xi1> to vector<2x128xi32>
    %45 = arith.sitofp %44 : vector<2x128xi32> to vector<2x128xf32>
    %46 = vector.shape_cast %32 : vector<4x8x2xf32> to vector<32x2xf32>
    %cst_15 = arith.constant dense<0.000000e+00> : vector<32x128xf32>
    %47 = tpu.matmul %46, %45, %cst_15 {dimension_numbers = #tpu.dot_dimension_numbers<[1], [0], [0], [1], [0, 0, 1, 1], [], []>} : vector<32x2xf32>, vector<2x128xf32>, vector<32x128xf32> -> vector<32x128xf32>
    %48 = vector.shape_cast %0 : vector<4x8x128xf32> to vector<32x128xf32>
    %49 = arith.mulf %47, %48 : vector<32x128xf32>
    %c0_16 = arith.constant 0 : index
    %c0_17 = arith.constant 0 : index
    %50 = vector.load %arg4[%c0_16, %c0_17] : memref<8x32xf32, #tpu.memory_space<vmem>>, vector<8x32xf32>
    %cst_18 = arith.constant dense<0.000000e+00> : vector<8x128xf32>
    %51 = tpu.matmul %50, %49, %cst_18 {dimension_numbers = #tpu.dot_dimension_numbers<[1], [0], [0], [1], [0, 0, 1, 1], [], []>} : vector<8x32xf32>, vector<32x128xf32>, vector<8x128xf32> -> vector<8x128xf32>
    %cst_19 = arith.constant dense<0.000000e+00> : vector<8xf32>
    %52 = vector.multi_reduction <add>, %51, %cst_19 [1] : vector<8x128xf32> to vector<8xf32>
    %53 = vector.shape_cast %52 : vector<8xf32> to vector<8x1xf32>
    %cst_20 = arith.constant 7.812500e-03 : f32
    %54 = vector.broadcast %cst_20 : f32 to vector<8x1xf32>
    %55 = arith.mulf %53, %54 : vector<8x1xf32>
    %56 = vector.broadcast %55 : vector<8x1xf32> to vector<8x128xf32>
    %57 = arith.subf %51, %56 : vector<8x128xf32>
    %58 = arith.mulf %57, %57 : vector<8x128xf32>
    %cst_21 = arith.constant dense<0.000000e+00> : vector<8xf32>
    %59 = vector.multi_reduction <add>, %58, %cst_21 [1] : vector<8x128xf32> to vector<8xf32>
    %60 = vector.shape_cast %59 : vector<8xf32> to vector<8x1xf32>
    %cst_22 = arith.constant 7.812500e-03 : f32
    %61 = vector.broadcast %cst_22 : f32 to vector<8x1xf32>
    %62 = arith.mulf %60, %61 : vector<8x1xf32>
    %c0_23 = arith.constant 0 : index
    %c0_24 = arith.constant 0 : index
    %63 = vector.load %arg5[%c0_23, %c0_24] : memref<8x2xf32, #tpu.memory_space<vmem>>, vector<8x2xf32>
    %64 = vector.extract_strided_slice %63 {offsets = [0, 0], sizes = [8, 1], strides = [1, 1]} : vector<8x2xf32> to vector<8x1xf32>
    %cst_25 = arith.constant 9.99999974E-6 : f32
    %65 = vector.broadcast %cst_25 : f32 to vector<8x1xf32>
    %66 = arith.addf %62, %65 : vector<8x1xf32>
    %67 = math.rsqrt %66 : vector<8x1xf32>
    %68 = arith.mulf %64, %67 : vector<8x1xf32>
    %69 = vector.broadcast %68 : vector<8x1xf32> to vector<8x128xf32>
    %70 = arith.mulf %57, %69 : vector<8x128xf32>
    %71 = vector.extract_strided_slice %63 {offsets = [0, 1], sizes = [8, 1], strides = [1, 1]} : vector<8x2xf32> to vector<8x1xf32>
    %72 = vector.broadcast %71 : vector<8x1xf32> to vector<8x128xf32>
    %73 = arith.addf %70, %72 : vector<8x128xf32>
    %c0_26 = arith.constant 0 : index
    %c0_27 = arith.constant 0 : index
    %74 = vector.load %arg6[%c0_26, %c0_27] : memref<8x128xf32, #tpu.memory_space<vmem>>, vector<8x128xf32>
    tpu.vector_store %arg6[%c0_26, %c0_27], %73 {strides = array<i32>} : memref<8x128xf32, #tpu.memory_space<vmem>>, vector<8x128xf32>,
    return
  }
  func.func @transform_0(%arg0: i32) -> (i32, i32, i32) {
    %c0_i32 = arith.constant 0 : i32
    %c0_i32_0 = arith.constant 0 : i32
    %c0_i32_1 = arith.constant 0 : i32
    %c0_i32_2 = arith.constant 0 : i32
    return %c0_i32, %c0_i32_0, %c0_i32_1 : i32, i32, i32
  }
  func.func @transform_1(%arg0: i32) -> (i32, i32) {
    %c0_i32 = arith.constant 0 : i32
    %c0_i32_0 = arith.constant 0 : i32
    %c0_i32_1 = arith.constant 0 : i32
    return %c0_i32, %c0_i32_0 : i32, i32
  }
  func.func @transform_2(%arg0: i32) -> (i32, i32) {
    %c0_i32 = arith.constant 0 : i32
    %c0_i32_0 = arith.constant 0 : i32
    %c0_i32_1 = arith.constant 0 : i32
    return %c0_i32, %c0_i32_0 : i32, i32
  }
  func.func @transform_3(%arg0: i32) -> (i32, i32) {
    %c0_i32 = arith.constant 0 : i32
    %c0_i32_0 = arith.constant 0 : i32
    %c0_i32_1 = arith.constant 0 : i32
    return %c0_i32, %c0_i32_0 : i32, i32
  }
  func.func @transform_4(%arg0: i32) -> (i32, i32) {
    %c0_i32 = arith.constant 0 : i32
    %c0_i32_0 = arith.constant 0 : i32
    %c0_i32_1 = arith.constant 0 : i32
    return %c0_i32, %c0_i32_0 : i32, i32
  }
  func.func @transform_5(%arg0: i32) -> (i32, i32) {
    %c0_i32 = arith.constant 0 : i32
    %c0_i32_0 = arith.constant 0 : i32
    %c0_i32_1 = arith.constant 0 : i32
    return %c0_i32, %c0_i32_0 : i32, i32
  }
}

</mosaic_0001>

<llo_original>
// kernel: multi_scale_attention_sk.1
$region0: #{multi_scale_attention_sk.1}
  #allocation0 [shape = 'u32[]', space=smem, size = 0x4, offset = 0x4, fixed_abs, tag = 'smem constant byte address 0x4 - core index']
  #allocation1 [shape = 'u32[144,128]{1,0:T(1,128)}', space=vmem, size = 0x12000, scoped, tag = 'internal scratch']
  %s0 = inlined_call_operand.vmem [shape: f32[4,8,128], index: 0, kind: input, shape index: {}]
  %s1 = inlined_call_operand.vmem [shape: f32[32,8], index: 1, kind: input, shape index: {}]
  %s2 = inlined_call_operand.vmem [shape: f32[32,1], index: 2, kind: input, shape index: {}]
  %s3 = inlined_call_operand.vmem [shape: f32[8,32], index: 3, kind: input, shape index: {}]
  %s4 = inlined_call_operand.vmem [shape: f32[8,2], index: 4, kind: input, shape index: {}]
  %s5 = inlined_call_operand.vmem [shape: f32[8,128], index: 5, kind: output, shape index: {}]
  %s6 = sld [smem:[#allocation0]]
  $region30: #{multi_scale_attention_sk.1} parent=0
    _
  %s8 = ssub.s32 1, %s6
  %s9 = scalar_select 0, %s8, %s6
  // Predicated region
  $region2: #{multi_scale_attention_sk.1} parent=0 // pred_check
    _
  $region3: #{multi_scale_attention_sk.1} parent=0 // pred_check_branch
    %11 = sbr.rel (0) target = $region5
  $region4: #{multi_scale_attention_sk.1} parent=0 // pred_region
    _
  $region5: #{multi_scale_attention_sk.1} parent=0 // pred_fallthru
    _
  // Predicated region
  $region6: #{multi_scale_attention_sk.1} parent=0 // pred_check
    _
  $region7: #{multi_scale_attention_sk.1} parent=0 // pred_check_branch
    %13 = sbr.rel (0) target = $region9
  $region8: #{multi_scale_attention_sk.1} parent=0 // pred_region
    _
  $region9: #{multi_scale_attention_sk.1} parent=0 // pred_fallthru
    _
  // Predicated region
  $region10: #{multi_scale_attention_sk.1} parent=0 // pred_check
    _
  $region11: #{multi_scale_attention_sk.1} parent=0 // pred_check_branch
    %15 = sbr.rel (0) target = $region13
  $region12: #{multi_scale_attention_sk.1} parent=0 // pred_region
    _
  $region13: #{multi_scale_attention_sk.1} parent=0 // pred_fallthru
    _
  // Predicated region
  $region14: #{multi_scale_attention_sk.1} parent=0 // pred_check
    _
  $region15: #{multi_scale_attention_sk.1} parent=0 // pred_check_branch
    %17 = sbr.rel (0) target = $region17
  $region16: #{multi_scale_attention_sk.1} parent=0 // pred_region
    _
  $region17: #{multi_scale_attention_sk.1} parent=0 // pred_fallthru
    _
  // Predicated region
  $region18: #{multi_scale_attention_sk.1} parent=0 // pred_check
    _
  $region19: #{multi_scale_attention_sk.1} parent=0 // pred_check_branch
    %19 = sbr.rel (0) target = $region21
  $region20: #{multi_scale_attention_sk.1} parent=0 // pred_region
    _
  $region21: #{multi_scale_attention_sk.1} parent=0 // pred_fallthru
    _
  %v20 = vld [vmem:[%s0] sm:$0xff]
  %v21 = vld [vmem:[%s0 + $0x8] sm:$0xff]
  %v22 = vld [vmem:[%s0 + $0x10] sm:$0xff]
  %v23 = vld [vmem:[%s0 + $0x18] sm:$0xff]
  %v24 = vadd.f32 %v20, %v21
  %v25 = vadd.f32 %v24, %v22
  %v26 = vadd.f32 %v25, %v23
  %v27 = vlaneseq
  %v28 = vand.u32 %v27, 127
  %v29 = vlaneseq
  %v30 = vshrl.u32 %v29, 7
  %v31 = vadd.s32 %v30, 8
  %v32 = vadd.s32 %v30, 16
  %v33 = vadd.s32 %v30, 24
  %v34 = vadd.s32 %v30, 32
  %v35 = vadd.s32 %v30, 40
  %v36 = vadd.s32 %v30, 48
  %v37 = vadd.s32 %v30, 56
  %v38 = vadd.s32 %v30, 64
  %v39 = vadd.s32 %v30, 72
  %v40 = vadd.s32 %v30, 80
  %v41 = vadd.s32 %v30, 88
  %v42 = vadd.s32 %v30, 96
  %v43 = vadd.s32 %v30, 104
  %v44 = vadd.s32 %v30, 112
  %v45 = vadd.s32 %v30, 120
  %v46 = vmul.u32 %v28, 64
  %vm47 = vcmp.ge.s32.totalorder %v30, %v46
  %vm48 = vcmp.ge.s32.totalorder %v31, %v46
  %vm49 = vcmp.ge.s32.totalorder %v32, %v46
  %vm50 = vcmp.ge.s32.totalorder %v33, %v46
  %vm51 = vcmp.ge.s32.totalorder %v34, %v46
  %vm52 = vcmp.ge.s32.totalorder %v35, %v46
  %vm53 = vcmp.ge.s32.totalorder %v36, %v46
  %vm54 = vcmp.ge.s32.totalorder %v37, %v46
  %vm55 = vcmp.ge.s32.totalorder %v38, %v46
  %vm56 = vcmp.ge.s32.totalorder %v39, %v46
  %vm57 = vcmp.ge.s32.totalorder %v40, %v46
  %vm58 = vcmp.ge.s32.totalorder %v41, %v46
  %vm59 = vcmp.ge.s32.totalorder %v42, %v46
  %vm60 = vcmp.ge.s32.totalorder %v43, %v46
  %vm61 = vcmp.ge.s32.totalorder %v44, %v46
  %vm62 = vcmp.ge.s32.totalorder %v45, %v46
  %v63 = vadd.s32 %v28, 1
  %v64 = vmul.u32 %v63, 64
  %vm65 = vcmp.lt.s32.totalorder %v30, %v64
  %vm66 = vcmp.lt.s32.totalorder %v31, %v64
  %vm67 = vcmp.lt.s32.totalorder %v32, %v64
  %vm68 = vcmp.lt.s32.totalorder %v33, %v64
  %vm69 = vcmp.lt.s32.totalorder %v34, %v64
  %vm70 = vcmp.lt.s32.totalorder %v35, %v64
  %vm71 = vcmp.lt.s32.totalorder %v36, %v64
  %vm72 = vcmp.lt.s32.totalorder %v37, %v64
  %vm73 = vcmp.lt.s32.totalorder %v38, %v64
  %vm74 = vcmp.lt.s32.totalorder %v39, %v64
  %vm75 = vcmp.lt.s32.totalorder %v40, %v64
  %vm76 = vcmp.lt.s32.totalorder %v41, %v64
  %vm77 = vcmp.lt.s32.totalorder %v42, %v64
  %vm78 = vcmp.lt.s32.totalorder %v43, %v64
  %vm79 = vcmp.lt.s32.totalorder %v44, %v64
  %vm80 = vcmp.lt.s32.totalorder %v45, %v64
  %vm81 = vmand %vm47, %vm65
  %vm82 = vmand %vm48, %vm66
  %vm83 = vmand %vm49, %vm67
  %vm84 = vmand %vm50, %vm68
  %vm85 = vmand %vm51, %vm69
  %vm86 = vmand %vm52, %vm70
  %vm87 = vmand %vm53, %vm71
  %vm88 = vmand %vm54, %vm72
  %vm89 = vmand %vm55, %vm73
  %vm90 = vmand %vm56, %vm74
  %vm91 = vmand %vm57, %vm75
  %vm92 = vmand %vm58, %vm76
  %vm93 = vmand %vm59, %vm77
  %vm94 = vmand %vm60, %vm78
  %vm95 = vmand %vm61, %vm79
  %vm96 = vmand %vm62, %vm80
  %v97 = vsel %vm81, 1, 0
  %v98 = vsel %vm82, 1, 0
  %v99 = vsel %vm83, 1, 0
  %v100 = vsel %vm84, 1, 0
  %v101 = vsel %vm85, 1, 0
  %v102 = vsel %vm86, 1, 0
  %v103 = vsel %vm87, 1, 0
  %v104 = vsel %vm88, 1, 0
  %v105 = vsel %vm89, 1, 0
  %v106 = vsel %vm90, 1, 0
  %v107 = vsel %vm91, 1, 0
  %v108 = vsel %vm92, 1, 0
  %v109 = vsel %vm93, 1, 0
  %v110 = vsel %vm94, 1, 0
  %v111 = vsel %vm95, 1, 0
  %v112 = vsel %vm96, 1, 0
  %v113 = vcvt.s32.f32 %v97
  %v114 = vcvt.s32.f32 %v98
  %v115 = vcvt.s32.f32 %v99
  %v116 = vcvt.s32.f32 %v100
  %v117 = vcvt.s32.f32 %v101
  %v118 = vcvt.s32.f32 %v102
  %v119 = vcvt.s32.f32 %v103
  %v120 = vcvt.s32.f32 %v104
  %v121 = vcvt.s32.f32 %v105
  %v122 = vcvt.s32.f32 %v106
  %v123 = vcvt.s32.f32 %v107
  %v124 = vcvt.s32.f32 %v108
  %v125 = vcvt.s32.f32 %v109
  %v126 = vcvt.s32.f32 %v110
  %v127 = vcvt.s32.f32 %v111
  %v128 = vcvt.s32.f32 %v112
  %129 = vmatprep.subr.mxu0 0.0
  %130 = vmatpush1.msra.mxu0 %v113
  %131 = vmatprep.subr.mxu0 0.0
  %132 = vmatpush1.msra.mxu0 %v114
  %133 = vmatprep.subr.mxu0 0.0
  %134 = vmatpush1.msra.mxu0 %v115
  %135 = vmatprep.subr.mxu0 0.0
  %136 = vmatpush1.msra.mxu0 %v116
  %137 = vmatprep.subr.mxu0 0.0
  %138 = vmatpush1.msra.mxu0 %v117
  %139 = vmatprep.subr.mxu0 0.0
  %140 = vmatpush1.msra.mxu0 %v118
  %141 = vmatprep.subr.mxu0 0.0
  %142 = vmatpush1.msra.mxu0 %v119
  %143 = vmatprep.subr.mxu0 0.0
  %144 = vmatpush1.msra.mxu0 %v120
  %145 = vmatprep.subr.mxu0 0.0
  %146 = vmatpush1.msra.mxu0 %v121
  %147 = vmatprep.subr.mxu0 0.0
  %148 = vmatpush1.msra.mxu0 %v122
  %149 = vmatprep.subr.mxu0 0.0
  %150 = vmatpush1.msra.mxu0 %v123
  %151 = vmatprep.subr.mxu0 0.0
  %152 = vmatpush1.msra.mxu0 %v124
  %153 = vmatprep.subr.mxu0 0.0
  %154 = vmatpush1.msra.mxu0 %v125
  %155 = vmatprep.subr.mxu0 0.0
  %156 = vmatpush1.msra.mxu0 %v126
  %157 = vmatprep.subr.mxu0 0.0
  %158 = vmatpush1.msra.mxu0 %v127
  %159 = vmatprep.subr.mxu0 0.0
  %160 = vmatpush1.msra.mxu0 %v128
  %161 = vmatprep.subr.mxu0 0.0
  %162 = vmatpush1.msra.mxu0 0.0
  %163 = vmatprep.subr.mxu0 0.0
  %164 = vmatpush1.msra.mxu0 0.0
  %165 = vmatprep.subr.mxu0 0.0
  %166 = vmatpush1.msra.mxu0 0.0
  %167 = vmatprep.subr.mxu0 0.0
  %168 = vmatpush1.msra.mxu0 0.0
  %169 = vmatprep.subr.mxu0 0.0
  %170 = vmatpush1.msra.mxu0 0.0
  %171 = vmatprep.subr.mxu0 0.0
  %172 = vmatpush1.msra.mxu0 0.0
  %173 = vmatprep.subr.mxu0 0.0
  %174 = vmatpush1.msra.mxu0 0.0
  %175 = vmatprep.subr.mxu0 0.0
  %176 = vmatpush1.msra.mxu0 0.0
  %177 = vmatprep.subr.mxu0 0.0
  %178 = vmatpush1.msra.mxu0 0.0
  %179 = vmatprep.subr.mxu0 0.0
  %180 = vmatpush1.msra.mxu0 0.0
  %181 = vmatprep.subr.mxu0 0.0
  %182 = vmatpush1.msra.mxu0 0.0
  %183 = vmatprep.subr.mxu0 0.0
  %184 = vmatpush1.msra.mxu0 0.0
  %185 = vmatprep.subr.mxu0 0.0
  %186 = vmatpush1.msra.mxu0 0.0
  %187 = vmatprep.subr.mxu0 0.0
  %188 = vmatpush1.msra.mxu0 0.0
  %189 = vmatprep.subr.mxu0 0.0
  %190 = vmatpush1.msra.mxu0 0.0
  %191 = vmatprep.subr.mxu0 0.0
  %192 = vmatpush1.msra.mxu0 0.0
  %193 = vmatprep.mubr.f32.mxu0 0.0
  %194 = vmatmul.mubr.f32.gmra.mrb[0].mxu0 %v26
  %v195 = vpop.f32.mrb[0].mxu0
  %v196 = vadd.f32 0.0, %v195
  %v197 = vpop.f32.mrb[0].mxu0
  %198 = vdwg.mxu0
  %v199 = vmul.f32 %v196, 0.015625
  %v200 = vld [vmem:[%s1] sm:$0xff]
  %v201 = vld [vmem:[%s1 + $0x8] sm:$0xff]
  %v202 = vld [vmem:[%s1 + $0x10] sm:$0xff]
  %v203 = vld [vmem:[%s1 + $0x18] sm:$0xff]
  %v204 = vld [vmem:[%s2] sm:$0xff]
  %v205 = vld [vmem:[%s2 + $0x8] sm:$0xff]
  %v206 = vld [vmem:[%s2 + $0x10] sm:$0xff]
  %v207 = vld [vmem:[%s2 + $0x18] sm:$0xff]
  %209 = vset.pattern.permute.xlu0 0
  %210 = vperm.xlu0 %209, %v204
  %v211 = vpop.permute.xlu0 %210
  %214 = vset.pattern.permute.xlu0 0
  %215 = vperm.xlu0 %214, %v205
  %v216 = vpop.permute.xlu0 %215
  %219 = vset.pattern.permute.xlu0 0
  %220 = vperm.xlu0 %219, %v206
  %v221 = vpop.permute.xlu0 %220
  %224 = vset.pattern.permute.xlu0 0
  %225 = vperm.xlu0 %224, %v207
  %v226 = vpop.permute.xlu0 %225
  %vm228 = vcmask 64512
  %v230 = vsel %vm228, %v200, 0
  %v233 = vsel %vm228, %v201, 0
  %v236 = vsel %vm228, %v202, 0
  %v239 = vsel %vm228, %v203, 0
  %241 = vmatprep.subr.mxu0 0.0
  %242 = vmatpush1.msra.mxu0 %v199
  %243 = vmatprep.subr.mxu0 0.0
  %244 = vmatpush1.msra.mxu0 0.0
  %245 = vmatprep.subr.mxu0 0.0
  %246 = vmatpush1.msra.mxu0 0.0
  %247 = vmatprep.subr.mxu0 0.0
  %248 = vmatpush1.msra.mxu0 0.0
  %249 = vmatprep.subr.mxu0 0.0
  %250 = vmatpush1.msra.mxu0 0.0
  %251 = vmatprep.subr.mxu0 0.0
  %252 = vmatpush1.msra.mxu0 0.0
  %253 = vmatprep.subr.mxu0 0.0
  %254 = vmatpush1.msra.mxu0 0.0
  %255 = vmatprep.subr.mxu0 0.0
  %256 = vmatpush1.msra.mxu0 0.0
  %257 = vmatprep.subr.mxu0 0.0
  %258 = vmatpush1.msra.mxu0 0.0
  %259 = vmatprep.subr.mxu0 0.0
  %260 = vmatpush1.msra.mxu0 0.0
  %261 = vmatprep.subr.mxu0 0.0
  %262 = vmatpush1.msra.mxu0 0.0
  %263 = vmatprep.subr.mxu0 0.0
  %264 = vmatpush1.msra.mxu0 0.0
  %265 = vmatprep.subr.mxu0 0.0
  %266 = vmatpush1.msra.mxu0 0.0
  %267 = vmatprep.subr.mxu0 0.0
  %268 = vmatpush1.msra.mxu0 0.0
  %269 = vmatprep.subr.mxu0 0.0
  %270 = vmatpush1.msra.mxu0 0.0
  %271 = vmatprep.subr.mxu0 0.0
  %272 = vmatpush1.msra.mxu0 0.0
  %273 = vmatprep.subr.mxu0 0.0
  %274 = vmatpush1.msra.mxu0 0.0
  %275 = vmatprep.subr.mxu0 0.0
  %276 = vmatpush1.msra.mxu0 0.0
  %277 = vmatprep.subr.mxu0 0.0
  %278 = vmatpush1.msra.mxu0 0.0
  %279 = vmatprep.subr.mxu0 0.0
  %280 = vmatpush1.msra.mxu0 0.0
  %281 = vmatprep.subr.mxu0 0.0
  %282 = vmatpush1.msra.mxu0 0.0
  %283 = vmatprep.subr.mxu0 0.0
  %284 = vmatpush1.msra.mxu0 0.0
  %285 = vmatprep.subr.mxu0 0.0
  %286 = vmatpush1.msra.mxu0 0.0
  %287 = vmatprep.subr.mxu0 0.0
  %288 = vmatpush1.msra.mxu0 0.0
  %289 = vmatprep.subr.mxu0 0.0
  %290 = vmatpush1.msra.mxu0 0.0
  %291 = vmatprep.subr.mxu0 0.0
  %292 = vmatpush1.msra.mxu0 0.0
  %293 = vmatprep.subr.mxu0 0.0
  %294 = vmatpush1.msra.mxu0 0.0
  %295 = vmatprep.subr.mxu0 0.0
  %296 = vmatpush1.msra.mxu0 0.0
  %297 = vmatprep.subr.mxu0 0.0
  %298 = vmatpush1.msra.mxu0 0.0
  %299 = vmatprep.subr.mxu0 0.0
  %300 = vmatpush1.msra.mxu0 0.0
  %301 = vmatprep.subr.mxu0 0.0
  %302 = vmatpush1.msra.mxu0 0.0
  %303 = vmatprep.subr.mxu0 0.0
  %304 = vmatpush1.msra.mxu0 0.0
  %305 = vmatprep.mubr.f32.mxu0 0.0
  %306 = vmatmul.mubr.f32.gmra.mrb[0].mxu0 %v230
  %v307 = vpop.f32.mrb[0].mxu0
  %v308 = vadd.f32 %v211, %v307
  %v309 = vpop.f32.mrb[0].mxu0
  %310 = vmatprep.mubr.f32.mxu0 0.0
  %311 = vmatmul.mubr.f32.gmra.mrb[0].mxu0 %v233
  %v312 = vpop.f32.mrb[0].mxu0
  %v313 = vadd.f32 %v216, %v312
  %v314 = vpop.f32.mrb[0].mxu0
  %315 = vmatprep.mubr.f32.mxu0 0.0
  %316 = vmatmul.mubr.f32.gmra.mrb[0].mxu0 %v236
  %v317 = vpop.f32.mrb[0].mxu0
  %v318 = vadd.f32 %v221, %v317
  %v319 = vpop.f32.mrb[0].mxu0
  %320 = vmatprep.mubr.f32.mxu0 0.0
  %321 = vmatmul.mubr.f32.gmra.mrb[0].mxu0 %v239
  %v322 = vpop.f32.mrb[0].mxu0
  %v323 = vadd.f32 %v226, %v322
  %v324 = vpop.f32.mrb[0].mxu0
  %325 = vdwg.mxu0
  %vm326 = vcmask 15360
  %v327 = vsel %vm326, %v308, -inf
  %v328 = vsel %vm326, %v313, -inf
  %v329 = vsel %vm326, %v318, -inf
  %v330 = vsel %vm326, %v323, -inf
  %v331 = vmax.f32 %v327, %v328
  %v332 = vmax.f32 %v329, %v330
  %v333 = vmax.f32 %v331, %v332
  %v334 = vsub.f32 %v308, %v333
  %v335 = vsub.f32 %v313, %v333
  %v336 = vsub.f32 %v318, %v333
  %v337 = vsub.f32 %v323, %v333
  %v338 = vmul.f32 %v334, 1.442695
  %v339 = vpow.pop %v338
  %v340 = vmul.f32 %v335, 1.442695
  %v341 = vpow.pop %v340
  %v342 = vmul.f32 %v336, 1.442695
  %v343 = vpow.pop %v342
  %v344 = vmul.f32 %v337, 1.442695
  %v345 = vpow.pop %v344
  %v346 = vsel %vm326, %v339, 0.0
  %v347 = vsel %vm326, %v341, 0.0
  %v348 = vadd.f32 %v346, %v347
  %v349 = vsel %vm326, %v343, 0.0
  %v350 = vadd.f32 %v348, %v349
  %v351 = vsel %vm326, %v345, 0.0
  %v352 = vadd.f32 %v350, %v351
  %v353 = vrcp.pop %v352
  %v354 = vmul.f32 %v339, %v353
  %v355 = vmul.f32 %v341, %v353
  %v356 = vmul.f32 %v343, %v353
  %v357 = vmul.f32 %v345, %v353
  %v358 = vmul.u32 %v30, 64
  %vm359 = vcmp.ge.s32.totalorder %v28, %v358
  %v360 = vadd.s32 %v30, 1
  %v361 = vmul.u32 %v360, 64
  %vm362 = vcmp.lt.s32.totalorder %v28, %v361
  %vm363 = vmand %vm359, %vm362
  %v364 = vsel %vm363, 1, 0
  %v365 = vcvt.s32.f32 %v364
  %v367 = vsel %vm326, %v354, 0
  %v370 = vsel %vm326, %v355, 0
  %v373 = vsel %vm326, %v356, 0
  %v376 = vsel %vm326, %v357, 0
  %vm378 = vcmask 1041408
  %v380 = vsel %vm378, %v365, 0
  %382 = vmatprep.subr.mxu0 0.0
  %383 = vmatpush1.msra.mxu0 %v380
  %384 = vmatprep.subr.mxu0 0.0
  %385 = vmatpush1.msra.mxu0 0.0
  %386 = vmatprep.subr.mxu0 0.0
  %387 = vmatpush1.msra.mxu0 0.0
  %388 = vmatprep.subr.mxu0 0.0
  %389 = vmatpush1.msra.mxu0 0.0
  %390 = vmatprep.subr.mxu0 0.0
  %391 = vmatpush1.msra.mxu0 0.0
  %392 = vmatprep.subr.mxu0 0.0
  %393 = vmatpush1.msra.mxu0 0.0
  %394 = vmatprep.subr.mxu0 0.0
  %395 = vmatpush1.msra.mxu0 0.0
  %396 = vmatprep.subr.mxu0 0.0
  %397 = vmatpush1.msra.mxu0 0.0
  %398 = vmatprep.subr.mxu0 0.0
  %399 = vmatpush1.msra.mxu0 0.0
  %400 = vmatprep.subr.mxu0 0.0
  %401 = vmatpush1.msra.mxu0 0.0
  %402 = vmatprep.subr.mxu0 0.0
  %403 = vmatpush1.msra.mxu0 0.0
  %404 = vmatprep.subr.mxu0 0.0
  %405 = vmatpush1.msra.mxu0 0.0
  %406 = vmatprep.subr.mxu0 0.0
  %407 = vmatpush1.msra.mxu0 0.0
  %408 = vmatprep.subr.mxu0 0.0
  %409 = vmatpush1.msra.mxu0 0.0
  %410 = vmatprep.subr.mxu0 0.0
  %411 = vmatpush1.msra.mxu0 0.0
  %412 = vmatprep.subr.mxu0 0.0
  %413 = vmatpush1.msra.mxu0 0.0
  %414 = vmatprep.subr.mxu0 0.0
  %415 = vmatpush1.msra.mxu0 0.0
  %416 = vmatprep.subr.mxu0 0.0
  %417 = vmatpush1.msra.mxu0 0.0
  %418 = vmatprep.subr.mxu0 0.0
  %419 = vmatpush1.msra.mxu0 0.0
  %420 = vmatprep.subr.mxu0 0.0
  %421 = vmatpush1.msra.mxu0 0.0
  %422 = vmatprep.subr.mxu0 0.0
  %423 = vmatpush1.msra.mxu0 0.0
  %424 = vmatprep.subr.mxu0 0.0
  %425 = vmatpush1.msra.mxu0 0.0
  %426 = vmatprep.subr.mxu0 0.0
  %427 = vmatpush1.msra.mxu0 0.0
  %428 = vmatprep.subr.mxu0 0.0
  %429 = vmatpush1.msra.mxu0 0.0
  %430 = vmatprep.subr.mxu0 0.0
  %431 = vmatpush1.msra.mxu0 0.0
  %432 = vmatprep.subr.mxu0 0.0
  %433 = vmatpush1.msra.mxu0 0.0
  %434 = vmatprep.subr.mxu0 0.0
  %435 = vmatpush1.msra.mxu0 0.0
  %436 = vmatprep.subr.mxu0 0.0
  %437 = vmatpush1.msra.mxu0 0.0
  %438 = vmatprep.subr.mxu0 0.0
  %439 = vmatpush1.msra.mxu0 0.0
  %440 = vmatprep.subr.mxu0 0.0
  %441 = vmatpush1.msra.mxu0 0.0
  %442 = vmatprep.subr.mxu0 0.0
  %443 = vmatpush1.msra.mxu0 0.0
  %444 = vmatprep.subr.mxu0 0.0
  %445 = vmatpush1.msra.mxu0 0.0
  %446 = vmatprep.mubr.f32.mxu0 0.0
  %447 = vmatmul.mubr.f32.gmra.mrb[0].mxu0 %v367
  %v448 = vpop.f32.mrb[0].mxu0
  %v449 = vadd.f32 0.0, %v448
  %v450 = vpop.f32.mrb[0].mxu0
  %451 = vmatprep.mubr.f32.mxu0 0.0
  %452 = vmatmul.mubr.f32.gmra.mrb[0].mxu0 %v370
  %v453 = vpop.f32.mrb[0].mxu0
  %v454 = vadd.f32 0.0, %v453
  %v455 = vpop.f32.mrb[0].mxu0
  %456 = vmatprep.mubr.f32.mxu0 0.0
  %457 = vmatmul.mubr.f32.gmra.mrb[0].mxu0 %v373
  %v458 = vpop.f32.mrb[0].mxu0
  %v459 = vadd.f32 0.0, %v458
  %v460 = vpop.f32.mrb[0].mxu0
  %461 = vmatprep.mubr.f32.mxu0 0.0
  %462 = vmatmul.mubr.f32.gmra.mrb[0].mxu0 %v376
  %v463 = vpop.f32.mrb[0].mxu0
  %v464 = vadd.f32 0.0, %v463
  %v465 = vpop.f32.mrb[0].mxu0
  %466 = vdwg.mxu0
  %v467 = vmul.f32 %v449, %v20
  %v468 = vmul.f32 %v454, %v21
  %v469 = vmul.f32 %v459, %v22
  %v470 = vmul.f32 %v464, %v23
  %v471 = vld [vmem:[%s3] sm:$0xff]
  %vm472 = vcmask 261120
  %v474 = vsel %vm472, %v471, 0
  %476 = vmatprep.subr.mxu0 0.0
  %477 = vmatpush1.msra.mxu0 %v467
  %478 = vmatprep.subr.mxu0 0.0
  %479 = vmatpush1.msra.mxu0 %v468
  %480 = vmatprep.subr.mxu0 0.0
  %481 = vmatpush1.msra.mxu0 %v469
  %482 = vmatprep.subr.mxu0 0.0
  %483 = vmatpush1.msra.mxu0 %v470
  %484 = vmatprep.subr.mxu0 0.0
  %485 = vmatpush1.msra.mxu0 0.0
  %486 = vmatprep.subr.mxu0 0.0
  %487 = vmatpush1.msra.mxu0 0.0
  %488 = vmatprep.subr.mxu0 0.0
  %489 = vmatpush1.msra.mxu0 0.0
  %490 = vmatprep.subr.mxu0 0.0
  %491 = vmatpush1.msra.mxu0 0.0
  %492 = vmatprep.subr.mxu0 0.0
  %493 = vmatpush1.msra.mxu0 0.0
  %494 = vmatprep.subr.mxu0 0.0
  %495 = vmatpush1.msra.mxu0 0.0
  %496 = vmatprep.subr.mxu0 0.0
  %497 = vmatpush1.msra.mxu0 0.0
  %498 = vmatprep.subr.mxu0 0.0
  %499 = vmatpush1.msra.mxu0 0.0
  %500 = vmatprep.subr.mxu0 0.0
  %501 = vmatpush1.msra.mxu0 0.0
  %502 = vmatprep.subr.mxu0 0.0
  %503 = vmatpush1.msra.mxu0 0.0
  %504 = vmatprep.subr.mxu0 0.0
  %505 = vmatpush1.msra.mxu0 0.0
  %506 = vmatprep.subr.mxu0 0.0
  %507 = vmatpush1.msra.mxu0 0.0
  %508 = vmatprep.subr.mxu0 0.0
  %509 = vmatpush1.msra.mxu0 0.0
  %510 = vmatprep.subr.mxu0 0.0
  %511 = vmatpush1.msra.mxu0 0.0
  %512 = vmatprep.subr.mxu0 0.0
  %513 = vmatpush1.msra.mxu0 0.0
  %514 = vmatprep.subr.mxu0 0.0
  %515 = vmatpush1.msra.mxu0 0.0
  %516 = vmatprep.subr.mxu0 0.0
  %517 = vmatpush1.msra.mxu0 0.0
  %518 = vmatprep.subr.mxu0 0.0
  %519 = vmatpush1.msra.mxu0 0.0
  %520 = vmatprep.subr.mxu0 0.0
  %521 = vmatpush1.msra.mxu0 0.0
  %522 = vmatprep.subr.mxu0 0.0
  %523 = vmatpush1.msra.mxu0 0.0
  %524 = vmatprep.subr.mxu0 0.0
  %525 = vmatpush1.msra.mxu0 0.0
  %526 = vmatprep.subr.mxu0 0.0
  %527 = vmatpush1.msra.mxu0 0.0
  %528 = vmatprep.subr.mxu0 0.0
  %529 = vmatpush1.msra.mxu0 0.0
  %530 = vmatprep.subr.mxu0 0.0
  %531 = vmatpush1.msra.mxu0 0.0
  %532 = vmatprep.subr.mxu0 0.0
  %533 = vmatpush1.msra.mxu0 0.0
  %534 = vmatprep.subr.mxu0 0.0
  %535 = vmatpush1.msra.mxu0 0.0
  %536 = vmatprep.subr.mxu0 0.0
  %537 = vmatpush1.msra.mxu0 0.0
  %538 = vmatprep.subr.mxu0 0.0
  %539 = vmatpush1.msra.mxu0 0.0
  %540 = vmatprep.mubr.f32.mxu0 0.0
  %541 = vmatmul.mubr.f32.gmra.mrb[0].mxu0 %v474
  %v542 = vpop.f32.mrb[0].mxu0
  %v543 = vadd.f32 0.0, %v542
  %v544 = vpop.f32.mrb[0].mxu0
  %545 = vdwg.mxu0
  %546 = vadd.xlane.f32.xlu0 %v543
  %v547 = vpop.xlane.xlu0 %546
  %v548 = vmul.f32 %v547, 0.0078125
  %v549 = vsub.f32 %v543, %v548
  %v550 = vmul.f32 %v549, %v549
  %551 = vadd.xlane.f32.xlu0 %v550
  %v552 = vpop.xlane.xlu0 %551
  %v553 = vmul.f32 %v552, 0.0078125
  %v554 = vld [vmem:[%s4] sm:$0xff]
  %v555 = vadd.f32 %v553, 1e-05
  %v556 = vrsqrt.pop %v555
  %v557 = vmul.f32 %v554, %v556
  %559 = vset.pattern.permute.xlu0 0
  %560 = vperm.xlu0 %559, %v557
  %v561 = vpop.permute.xlu0 %560
  %v563 = vmul.f32 %v549, %v561
  %565 = vset.pattern.permute.xlu0 1
  %566 = vperm.xlu0 %565, %v554
  %v567 = vpop.permute.xlu0 %566
  %v569 = vadd.f32 %v563, %v567
  %570 = vst [vmem:[%s5] sm:$0xff] %v569
  // Predicated region
  $region22: #{multi_scale_attention_sk.1} parent=0 // pred_check
    _
  $region23: #{multi_scale_attention_sk.1} parent=0 // pred_check_branch
    %572 = sbr.rel (0) target = $region25
  $region24: #{multi_scale_attention_sk.1} parent=0 // pred_region
    _
  $region25: #{multi_scale_attention_sk.1} parent=0 // pred_fallthru
    _
  // Predicated region
  $region26: #{multi_scale_attention_sk.1} parent=0 // pred_check
    _
  $region27: #{multi_scale_attention_sk.1} parent=0 // pred_check_branch
    %574 = sbr.rel (0) target = $region29
  $region28: #{multi_scale_attention_sk.1} parent=0 // pred_region
    _
  $region29: #{multi_scale_attention_sk.1} parent=0 // pred_fallthru
    _

</llo_original>
